<compile_context>
chip_gen: v6e
topology: v6e:2x2x1
jax: 0.10.0
libtpu: 0.0.40
codegen_flags: <defaults>
</compile_context>

<pallas_src>
import functools

import jax
import jax.numpy as jnp
from jax.experimental import pallas as pl
from jax.experimental.pallas import tpu as pltpu


# Per-sample slab threshold for the fused resident path (4 double-buffered
# copies of a 4 MiB slab = 16 MiB, comfortably under the 32 MiB scoped limit).
FUSED_SLAB_BYTES = 4 * 1024 * 1024
# Per-block budget for the streaming fallback (bigger tiles keep v6e/v7x near
# their HBM roofline; per-step overhead ~0.35us is amortized).
STREAM_TILE_BYTES = 4 * 1024 * 1024
# Explicit scoped-VMEM limit so the larger tiles also work on v5e (16 MiB
# default) while staying inside v7x's 64 MiB physical VMEM.
VMEM_LIMIT_BYTES = 32 * 1024 * 1024


# ---------------------------------------------------------------------------
# Fused single-pass kernel: sample resident in VMEM.
# ---------------------------------------------------------------------------
def _se_fused_kernel(x_ref, w1_ref, w2_ref, o_ref, *, inv_hw):
    x = x_ref[0]                                                    # (C, HW)
    # Global average pool: lane-axis (XLU) reduction, f32 accumulation.
    pooled = jnp.sum(x, axis=-1, keepdims=True, dtype=jnp.float32) * inv_hw  # (C, 1)
    wdt = w1_ref.dtype
    # FC1 -> ReLU -> FC2 -> sigmoid, all in the NCHW-native (C, 1) column
    # orientation (no transposes).  Weights stay in their native dtype; the
    # MXU accumulates in f32 via preferred_element_type.
    h = jnp.dot(w1_ref[...], pooled.astype(wdt),
                preferred_element_type=jnp.float32)                 # (C_red, 1)
    h = jnp.maximum(h, 0.0)
    gate = jax.nn.sigmoid(jnp.dot(w2_ref[...], h.astype(wdt),
                                  preferred_element_type=jnp.float32))  # (C, 1)
    # One native-dtype multiply (lane-broadcast of the gate) + lane-dense store.
    o_ref[0] = x * gate.astype(x.dtype)


# ---------------------------------------------------------------------------
# Streaming fallback, pass 1: per-chunk f32 partial spatial sums.
# ---------------------------------------------------------------------------
def _partial_sum_kernel(x_ref, psum_ref, *, hw_total, t_hw, need_mask):
    x = x_ref[0]                                                    # (C, T_hw)
    if need_mask:
        t = pl.program_id(1)
        lane = jax.lax.broadcasted_iota(jnp.int32, x.shape, 1)
        x = jnp.where(t * t_hw + lane < hw_total, x, jnp.zeros([], x.dtype))
    psum_ref[0, 0] = jnp.sum(x, axis=-1, keepdims=True, dtype=jnp.float32)  # (C, 1)


# ---------------------------------------------------------------------------
# Streaming fallback, pass 2: channel-wise rescale.
# ---------------------------------------------------------------------------
def _rescale_kernel(x_ref, g_ref, o_ref):
    # (C, T_hw) * (C, 1) lane-broadcast, native dtype, lane-dense store.
    o_ref[0] = x_ref[0] * g_ref[0]


def _pick_hw_tile(hw, c, itemsize, budget_bytes):
    """Largest lane-aligned (multiple of 128) HW tile fitting the budget."""
    max_lanes = budget_bytes // (c * itemsize)
    if max_lanes >= hw:
        return hw
    t = (max_lanes // 128) * 128
    if t < 128:
        # Huge-C / tiny-HW slab: a 128-lane block would already blow the
        # budget.  Fall back to a single full-HW block.
        # TODO(synk): tile over C instead for huge-C, tiny-HW feature maps.
        return hw
    return t


def se_module(x_nchw, w_fc1, w_fc2, *,
              fused_slab_bytes=FUSED_SLAB_BYTES,
              stream_tile_budget_bytes=STREAM_TILE_BYTES):
    """SEModule forward.

    x_nchw: (N, C, H, W)
    w_fc1:  (C_red, C)  -- Conv2d(C, C_red, 1, bias=False) weight squeezed
    w_fc2:  (C, C_red)  -- Conv2d(C_red, C, 1, bias=False) weight squeezed
    returns (N, C, H, W)
    """
    N, C, H, W = x_nchw.shape
    C_red = w_fc1.shape[0]
    HW = H * W
    dt = x_nchw.dtype
    itemsize = jnp.dtype(dt).itemsize

    x = x_nchw.reshape(N, C, HW)  # contiguous reshape: no data movement

    # ---------------- fused single-pass resident path ----------------
    if C * HW * itemsize <= fused_slab_bytes:
        out = pl.pallas_call(
            functools.partial(_se_fused_kernel, inv_hw=1.0 / HW),
            out_shape=jax.ShapeDtypeStruct((N, C, HW), dt),
            grid_spec=pltpu.PrefetchScalarGridSpec(
                num_scalar_prefetch=0,
                grid=(N,),
                in_specs=[
                    pl.BlockSpec((1, C, HW), lambda n: (n, 0, 0)),
                    pl.BlockSpec((C_red, C), lambda n: (0, 0)),
                    pl.BlockSpec((C, C_red), lambda n: (0, 0)),
                ],
                out_specs=pl.BlockSpec((1, C, HW), lambda n: (n, 0, 0)),
            ),
            compiler_params=pltpu.CompilerParams(
                dimension_semantics=("parallel",),
                vmem_limit_bytes=VMEM_LIMIT_BYTES),
        )(x, w_fc1, w_fc2)
        return out.reshape(N, C, H, W)

    # ---------------- two-pass streaming fallback ----------------
    T = _pick_hw_tile(HW, C, itemsize, stream_tile_budget_bytes)
    n_chunks = pl.cdiv(HW, T)
    need_mask = (HW % T) != 0

    # Pass 1: per-chunk partial sums, fully parallel over (N, chunks) so both
    # v7x TensorCores stay busy even at N == 1.
    psum = pl.pallas_call(
        functools.partial(_partial_sum_kernel,
                          hw_total=HW, t_hw=T, need_mask=need_mask),
        out_shape=jax.ShapeDtypeStruct((N, n_chunks, C, 1), jnp.float32),
        grid_spec=pltpu.PrefetchScalarGridSpec(
            num_scalar_prefetch=0,
            grid=(N, n_chunks),
            in_specs=[pl.BlockSpec((1, C, T), lambda n, t: (n, 0, t))],
            out_specs=pl.BlockSpec((1, 1, C, 1), lambda n, t: (n, t, 0, 0)),
        ),
        compiler_params=pltpu.CompilerParams(
            dimension_semantics=("parallel", "parallel"),
            vmem_limit_bytes=VMEM_LIMIT_BYTES),
    )(x)

    # Tiny gate math (O(N*C*C_red) FLOPs) in plain XLA: batches the M=1 matmul
    # over N and keeps the weights (and any f32 upcasts) out of the streaming
    # kernels' VMEM budget.
    pooled = jnp.sum(psum[..., 0], axis=1) * (1.0 / HW)          # (N, C) f32
    h = jnp.maximum(pooled @ jnp.transpose(w_fc1).astype(jnp.float32), 0.0)
    gate = jax.nn.sigmoid(h @ jnp.transpose(w_fc2).astype(jnp.float32))
    g = gate.astype(dt)[:, :, None]                              # (N, C, 1)

    # Pass 2: channel-wise rescale, fully parallel over (N, chunks).
    out = pl.pallas_call(
        _rescale_kernel,
        out_shape=jax.ShapeDtypeStruct((N, C, HW), dt),
        grid_spec=pltpu.PrefetchScalarGridSpec(
            num_scalar_prefetch=0,
            grid=(N, n_chunks),
            in_specs=[
                pl.BlockSpec((1, C, T), lambda n, t: (n, 0, t)),
                pl.BlockSpec((1, C, 1), lambda n, t: (n, 0, 0)),
            ],
            out_specs=pl.BlockSpec((1, C, T), lambda n, t: (n, 0, t)),
        ),
        compiler_params=pltpu.CompilerParams(
            dimension_semantics=("parallel", "parallel"),
            vmem_limit_bytes=VMEM_LIMIT_BYTES),
    )(x, g)
    return out.reshape(N, C, H, W)


def se_module_ref(x_nchw, w_fc1, w_fc2):
    """Pure-JAX reference mirroring the PyTorch forward."""
    pooled = jnp.mean(x_nchw, axis=(2, 3))                      # (N, C)
    h = jnp.maximum(pooled @ w_fc1.T, 0.0)                      # (N, C_red)
    s = jax.nn.sigmoid(h @ w_fc2.T)                             # (N, C)
    return x_nchw * s[:, :, None, None]


if __name__ == "__main__":
    key = jax.random.PRNGKey(0)
    kx, k1, k2, kx2 = jax.random.split(key, 4)

    # Small shapes consistent with SEModule(channels=8, reduction=4).
    N, C, H, W = 2, 8, 16, 16
    reduction = 4
    C_red = C // reduction

    x = jax.random.normal(kx, (N, C, H, W), dtype=jnp.float32)
    # Conv2d weights have shape (out, in, 1, 1); squeeze the 1x1 kernel dims.
    w_fc1 = (jax.random.normal(k1, (C_red, C, 1, 1), dtype=jnp.float32)
             * 0.1).reshape(C_red, C)
    w_fc2 = (jax.random.normal(k2, (C, C_red, 1, 1), dtype=jnp.float32)
             * 0.1).reshape(C, C_red)

    # Config A: fused single-pass resident path (the default for SE shapes).
    out = jax.block_until_ready(se_module(x, w_fc1, w_fc2))
    ref = se_module_ref(x, w_fc1, w_fc2)
    assert out.shape == (N, C, H, W)
    assert jnp.allclose(out, ref, atol=1e-5, rtol=1e-5)

    # Config B: force the two-pass streaming fallback with a tiled HW axis and
    # a masked tail (HW=144 -> T=128 + tail of 16), so both paths are exercised.
    H2 = W2 = 12
    x2 = jax.random.normal(kx2, (N, C, H2, W2), dtype=jnp.float32)
    out2 = jax.block_until_ready(
        se_module(x2, w_fc1, w_fc2,
                  fused_slab_bytes=0, stream_tile_budget_bytes=4096))
    ref2 = se_module_ref(x2, w_fc1, w_fc2)
    assert out2.shape == (N, C, H2, W2)
    assert jnp.allclose(out2, ref2, atol=1e-5, rtol=1e-5)

    print("KERNEL_OK")
</pallas_src>

<mosaic_0001>
module attributes {stable_mosaic.version = 11 : i64} {
  func.func @_se_fused_kernel(%arg0: i32, %arg1: memref<1x8x256xf32, #tpu.memory_space<vmem>>, %arg2: memref<2x8xf32, #tpu.memory_space<vmem>>, %arg3: memref<8x2xf32, #tpu.memory_space<vmem>>, %arg4: memref<1x8x256xf32, #tpu.memory_space<vmem>>) attributes {dimension_semantics = [#tpu.dimension_semantics<parallel>], iteration_bounds = array<i64: 2>, scalar_prefetch = 0 : i64, scratch_operands = 0 : i64, tpu.core_type = #tpu.core_type<tc>, window_params = [{transform_indices = @transform_0, window_bounds = array<i64: 1, 8, 256>}, {pipeline_mode = #tpu.pipeline_mode<synchronous>, transform_indices = @transform_1, window_bounds = array<i64: 2, 8>}, {pipeline_mode = #tpu.pipeline_mode<synchronous>, transform_indices = @transform_2, window_bounds = array<i64: 8, 2>}, {transform_indices = @transform_3, window_bounds = array<i64: 1, 8, 256>}]} {
    %c0 = arith.constant 0 : index
    %c0_0 = arith.constant 0 : index
    %c0_1 = arith.constant 0 : index
    %0 = vector.load %arg1[%c0, %c0_0, %c0_1] : memref<1x8x256xf32, #tpu.memory_space<vmem>>, vector<1x8x256xf32>
    %1 = vector.shape_cast %0 : vector<1x8x256xf32> to vector<8x256xf32>
    %cst = arith.constant dense<0.000000e+00> : vector<8xf32>
    %2 = vector.multi_reduction <add>, %1, %cst [1] : vector<8x256xf32> to vector<8xf32>
    %3 = vector.shape_cast %2 : vector<8xf32> to vector<8x1xf32>
    %cst_2 = arith.constant 3.906250e-03 : f32
    %4 = vector.broadcast %cst_2 : f32 to vector<8x1xf32>
    %5 = arith.mulf %3, %4 : vector<8x1xf32>
    %c0_3 = arith.constant 0 : index
    %c0_4 = arith.constant 0 : index
    %6 = vector.load %arg2[%c0_3, %c0_4] : memref<2x8xf32, #tpu.memory_space<vmem>>, vector<2x8xf32>
    %cst_5 = arith.constant dense<0.000000e+00> : vector<2x1xf32>
    %7 = tpu.matmul %6, %5, %cst_5 {dimension_numbers = #tpu.dot_dimension_numbers<[1], [0], [0], [1], [0, 0, 1, 1], [], []>} : vector<2x8xf32>, vector<8x1xf32>, vector<2x1xf32> -> vector<2x1xf32>
    %cst_6 = arith.constant 0.000000e+00 : f32
    %8 = vector.broadcast %cst_6 : f32 to vector<2x1xf32>
    %9 = arith.maximumf %7, %8 : vector<2x1xf32>
    %c0_7 = arith.constant 0 : index
    %c0_8 = arith.constant 0 : index
    %10 = vector.load %arg3[%c0_7, %c0_8] : memref<8x2xf32, #tpu.memory_space<vmem>>, vector<8x2xf32>
    %cst_9 = arith.constant dense<0.000000e+00> : vector<8x1xf32>
    %11 = tpu.matmul %10, %9, %cst_9 {dimension_numbers = #tpu.dot_dimension_numbers<[1], [0], [0], [1], [0, 0, 1, 1], [], []>} : vector<8x2xf32>, vector<2x1xf32>, vector<8x1xf32> -> vector<8x1xf32>
    %12 = arith.negf %11 : vector<8x1xf32>
    %13 = math.exp %12 : vector<8x1xf32>
    %cst_10 = arith.constant 1.000000e+00 : f32
    %14 = vector.broadcast %cst_10 : f32 to vector<8x1xf32>
    %15 = arith.addf %14, %13 : vector<8x1xf32>
    %16 = arith.divf %14, %15 : vector<8x1xf32>
    %17 = vector.broadcast %16 : vector<8x1xf32> to vector<8x256xf32>
    %18 = arith.mulf %1, %17 : vector<8x256xf32>
    %c0_11 = arith.constant 0 : index
    %c0_12 = arith.constant 0 : index
    %c0_13 = arith.constant 0 : index
    %19 = vector.load %arg4[%c0_11, %c0_12, %c0_13] : memref<1x8x256xf32, #tpu.memory_space<vmem>>, vector<1x8x256xf32>
    %20 = vector.shape_cast %19 : vector<1x8x256xf32> to vector<8x256xf32>
    %21 = vector.shape_cast %18 : vector<8x256xf32> to vector<1x8x256xf32>
    tpu.vector_store %arg4[%c0_11, %c0_12, %c0_13], %21 {strides = array<i32>} : memref<1x8x256xf32, #tpu.memory_space<vmem>>, vector<1x8x256xf32>,
    return
  }
  func.func @transform_0(%arg0: i32) -> (i32, i32, i32) {
    %c0_i32 = arith.constant 0 : i32
    %c0_i32_0 = arith.constant 0 : i32
    %c0_i32_1 = arith.constant 0 : i32
    return %arg0, %c0_i32, %c0_i32_0 : i32, i32, i32
  }
  func.func @transform_1(%arg0: i32) -> (i32, i32) {
    %c0_i32 = arith.constant 0 : i32
    %c0_i32_0 = arith.constant 0 : i32
    %c0_i32_1 = arith.constant 0 : i32
    return %c0_i32, %c0_i32_0 : i32, i32
  }
  func.func @transform_2(%arg0: i32) -> (i32, i32) {
    %c0_i32 = arith.constant 0 : i32
    %c0_i32_0 = arith.constant 0 : i32
    %c0_i32_1 = arith.constant 0 : i32
    return %c0_i32, %c0_i32_0 : i32, i32
  }
  func.func @transform_3(%arg0: i32) -> (i32, i32, i32) {
    %c0_i32 = arith.constant 0 : i32
    %c0_i32_0 = arith.constant 0 : i32
    %c0_i32_1 = arith.constant 0 : i32
    return %arg0, %c0_i32, %c0_i32_0 : i32, i32, i32
  }
}

</mosaic_0001>

<llo_original>
// kernel: tpu_custom_call.1
$region0: #{tpu_custom_call.1}
  #allocation0 [shape = 'u32[]', space=smem, size = 0x4, offset = 0x4, fixed_abs, tag = 'smem constant byte address 0x4 - core index']
  #allocation1 [shape = 'u32[144,128]{1,0:T(1,128)}', space=vmem, size = 0x12000, scoped, tag = 'internal scratch']
  %s0 = inlined_call_operand.hbm [shape: f32[2,8,256], index: 0, kind: input, shape index: {}]
  %s1 = inlined_call_operand.vmem [shape: f32[2,8], index: 1, kind: input, shape index: {}]
  %s2 = inlined_call_operand.vmem [shape: f32[8,2], index: 2, kind: input, shape index: {}]
  %s3 = inlined_call_operand.hbm [shape: f32[2,8,256], index: 3, kind: output, shape index: {}]
  %s4 = sld [smem:[#allocation0]]
  $region49: #{tpu_custom_call.1} parent=0
    _
  %s6 = ssub.s32 1, %s4
  %s7 = scalar_select 0, %s6, %s4
  $region1: #{tpu_custom_call.1} parent=0
    #allocation2 [shape = 'u8[16384]{0}', space=vmem, size = 0x4000, scoped, tag = 'input window, operand 0']
    #allocation3 [shape = 's32[2]{0}', space=sflag, size = 0x8, scoped, tag = 'scoped memory for tpu_custom_call.1']
    #allocation4 [shape = 's32[2]{0}', space=sflag, size = 0x8, scoped, tag = 'scoped memory for tpu_custom_call.1']
    #allocation5 [shape = 'u8[16384]{0}', space=vmem, size = 0x4000, scoped, tag = 'output window, operand 0']
    %8 = vsyncpa [#allocation3], 0
    %s9 = scalar_lea.sflag [#allocation3], 1
    %10 = vsyncpa %s9, 0
    %11 = vsyncpa [#allocation4], 0
    %s12 = scalar_lea.sflag [#allocation4], 1
    %13 = vsyncpa %s12, 0
    loop: start=0, step=1, limit=4
    $region2: #{tpu_custom_call.1} parent=1 // loop_pre_header
      _
    $region3: #{tpu_custom_call.1} parent=1 // loop_header
      %s15 = sphi 0, %s19
      %p16 = scmp.ge.s32.totalorder %s15, 4
      %s25 = sphi 0, %s27
      %s28 = sphi 0, %s25
      %s29 = sphi 0, %s28
      %s45 = sphi 0, %s29
      %s49 = sphi 0, %s49
      %s51 = sphi 0, %s49
      %s52 = sphi 0, %s51
      %s66 = sphi 0, %s52
      %s70 = sphi 0, %s70
      %s72 = sphi 0, %s70
      %s73 = sphi 0, %s72
      %s87 = sphi 0, %s73
      %s93 = sphi 0, %s95
      %s96 = sphi 0, %s93
      %s97 = sphi 0, %s96
      %s113 = sphi 0, %s97
    $region4: #{tpu_custom_call.1} parent=1 // loop_header_branch
      %18 = sbr.rel (%p16) target = $region8
    $region5: #{tpu_custom_call.1} parent=1 // loop_body
      %s20 = ssub.s32 %s15, 1
      %s21 = ssub.s32 %s15, 2
      %s22 = sadd.s32 %s15, 1
      %s23 = ssub.s32 %s15, %s22
      %p24 = scmp.eq.s32.totalorder %s23, 0
      %s26 = sadd.s32 %s25, 1
      %s27 = scalar_select %p24, %s25, %s26
      %p30 = pneg %p24
      %p31 = scmp.eq.s32.totalorder %s15, 1
      %p32 = por %p30, %p31
      %p33 = scmp.ne.s32.totalorder %s25, %s28
      %p34 = scmp.eq.s32.totalorder %s15, 0
      %p35 = por %p33, %p34
      %p36 = scmp.ne.s32.totalorder %s25, %s28
      %p37 = scmp.eq.s32.totalorder %s20, 1
      %p38 = por %p36, %p37
      %p39 = scmp.ne.s32.totalorder %s28, %s29
      %p40 = scmp.eq.s32.totalorder %s20, 0
      %p41 = por %p39, %p40
      %p42 = scmp.ne.s32.totalorder %s28, %s29
      %p43 = scmp.eq.s32.totalorder %s21, 1
      %p44 = por %p42, %p43
      %p46 = scmp.ne.s32.totalorder %s29, %s45
      %p47 = scmp.eq.s32.totalorder %s21, 0
      %p48 = por %p46, %p47
      %s50 = sadd.s32 %s49, 1
      %p53 = scmp.eq.s32.totalorder %s15, 1
      %p54 = scmp.ne.s32.totalorder %s49, %s51
      %p55 = scmp.eq.s32.totalorder %s15, 0
      %p56 = por %p54, %p55
      %p57 = scmp.ne.s32.totalorder %s49, %s51
      %p58 = scmp.eq.s32.totalorder %s20, 1
      %p59 = por %p57, %p58
      %p60 = scmp.ne.s32.totalorder %s51, %s52
      %p61 = scmp.eq.s32.totalorder %s20, 0
      %p62 = por %p60, %p61
      %p63 = scmp.ne.s32.totalorder %s51, %s52
      %p64 = scmp.eq.s32.totalorder %s21, 1
      %p65 = por %p63, %p64
      %p67 = scmp.ne.s32.totalorder %s52, %s66
      %p68 = scmp.eq.s32.totalorder %s21, 0
      %p69 = por %p67, %p68
      %s71 = sadd.s32 %s70, 1
      %p74 = scmp.eq.s32.totalorder %s15, 1
      %p75 = scmp.ne.s32.totalorder %s70, %s72
      %p76 = scmp.eq.s32.totalorder %s15, 0
      %p77 = por %p75, %p76
      %p78 = scmp.ne.s32.totalorder %s70, %s72
      %p79 = scmp.eq.s32.totalorder %s20, 1
      %p80 = por %p78, %p79
      %p81 = scmp.ne.s32.totalorder %s72, %s73
      %p82 = scmp.eq.s32.totalorder %s20, 0
      %p83 = por %p81, %p82
      %p84 = scmp.ne.s32.totalorder %s72, %s73
      %p85 = scmp.eq.s32.totalorder %s21, 1
      %p86 = por %p84, %p85
      %p88 = scmp.ne.s32.totalorder %s73, %s87
      %p89 = scmp.eq.s32.totalorder %s21, 0
      %p90 = por %p88, %p89
      %s91 = ssub.s32 %s15, %s22
      %p92 = scmp.eq.s32.totalorder %s91, 0
      %s94 = sadd.s32 %s93, 1
      %s95 = scalar_select %p92, %s93, %s94
      %p98 = pneg %p92
      %p99 = scmp.eq.s32.totalorder %s15, 1
      %p100 = por %p98, %p99
      %p101 = scmp.ne.s32.totalorder %s93, %s96
      %p102 = scmp.eq.s32.totalorder %s15, 0
      %p103 = por %p101, %p102
      %p104 = scmp.ne.s32.totalorder %s93, %s96
      %p105 = scmp.eq.s32.totalorder %s20, 1
      %p106 = por %p104, %p105
      %p107 = scmp.ne.s32.totalorder %s96, %s97
      %p108 = scmp.eq.s32.totalorder %s20, 0
      %p109 = por %p107, %p108
      %p110 = scmp.ne.s32.totalorder %s96, %s97
      %p111 = scmp.eq.s32.totalorder %s21, 1
      %p112 = por %p110, %p111
      %p114 = scmp.ne.s32.totalorder %s97, %s113
      %p115 = scmp.eq.s32.totalorder %s21, 0
      %p116 = por %p114, %p115
      %p117 = scmp.le.s32.totalorder 1, %s15
      %p118 = scmp.lt.s32.totalorder %s15, 3
      %p119 = pnand %p117, %p118
      %p120 = pneg %p119
      // Predicated region
      $region9: #{tpu_custom_call.1} parent=5 // pred_check
        _
      $region10: #{tpu_custom_call.1} parent=5 // pred_check_branch
        %122 = sbr.rel (%p119) target = $region12
      $region11: #{tpu_custom_call.1} parent=5 // pred_region
        %s123 = ssub.s32 %s15, 1
        // Predicated region
        $region13: #{tpu_custom_call.1} parent=11 // pred_check
          %p124 = pneg %p62
        $region14: #{tpu_custom_call.1} parent=11 // pred_check_branch
          %126 = sbr.rel (%p124) target = $region16
        $region15: #{tpu_custom_call.1} parent=11 // pred_region
          _
        $region16: #{tpu_custom_call.1} parent=11 // pred_fallthru
          _
        // Predicated region
        $region17: #{tpu_custom_call.1} parent=11 // pred_check
          %p127 = pneg %p83
        $region18: #{tpu_custom_call.1} parent=11 // pred_check_branch
          %129 = sbr.rel (%p127) target = $region20
        $region19: #{tpu_custom_call.1} parent=11 // pred_region
          _
        $region20: #{tpu_custom_call.1} parent=11 // pred_fallthru
          _
      $region12: #{tpu_custom_call.1} parent=5 // pred_fallthru
        _
      %p130 = scmp.lt.s32.totalorder %s15, 2
      // Predicated region
      $region21: #{tpu_custom_call.1} parent=5 // pred_check
        %p131 = pneg %p130
      $region22: #{tpu_custom_call.1} parent=5 // pred_check_branch
        %133 = sbr.rel (%p131) target = $region24
      $region23: #{tpu_custom_call.1} parent=5 // pred_region
        // Predicated region
        $region25: #{tpu_custom_call.1} parent=23 // pred_check
          %p134 = pneg %p35
        $region26: #{tpu_custom_call.1} parent=23 // pred_check_branch
          %136 = sbr.rel (%p134) target = $region28
        $region27: #{tpu_custom_call.1} parent=23 // pred_region
          %s137 = sand.u32 %s25, 1
          %s138 = scalar_lea.sflag [#allocation3], %s137
          %s139 = sand.u32 %s25, 1
          %s140 = smul.addr %s139, 16
          %s141 = scalar_lea.vmem [#allocation2], %s140
          %s143 = ssub.s32 256, 256
          %144 = vsyncadd %s138, %s143
          %s145 = smul.addr %s15, 2
          %s146 = smul.addr %s145, 128
          %s147 = scalar_lea.hbm %s0, %s146
          %s149 = sshll.u32 %s141, 4
          %s150 = int_to_ptr.vmem [resolvable:$true] %s149
          %152 = dma.hbm_to_vmem [thread:$0]  %s147, 256, %s150, %s138
        $region28: #{tpu_custom_call.1} parent=23 // pred_fallthru
          _
      $region24: #{tpu_custom_call.1} parent=5 // pred_fallthru
        _
      %p153 = scmp.le.s32.totalorder 1, %s15
      %p154 = scmp.lt.s32.totalorder %s15, 3
      %p155 = pnand %p153, %p154
      %p156 = pneg %p155
      // Predicated region
      $region29: #{tpu_custom_call.1} parent=5 // pred_check
        _
      $region30: #{tpu_custom_call.1} parent=5 // pred_check_branch
        %158 = sbr.rel (%p155) target = $region32
      $region31: #{tpu_custom_call.1} parent=5 // pred_region
        %s159 = ssub.s32 %s15, 1
        %s160 = sand.u32 %s28, 1
        %s161 = scalar_lea.sflag [#allocation3], %s160
        %s162 = sand.u32 %s28, 1
        %s163 = smul.addr %s162, 16
        %s164 = scalar_lea.vmem [#allocation2], %s163
        // Predicated region
        $region33: #{tpu_custom_call.1} parent=31 // pred_check
          %p165 = pneg %p41
        $region34: #{tpu_custom_call.1} parent=31 // pred_check_branch
          %167 = sbr.rel (%p165) target = $region36
        $region35: #{tpu_custom_call.1} parent=31 // pred_region
          %168 = dma.done %s161, 256
        $region36: #{tpu_custom_call.1} parent=31 // pred_fallthru
          _
        %s169 = sand.u32 %s28, 1
        %s170 = scalar_lea.sflag [#allocation3], %s169
        %s171 = sand.u32 %s28, 1
        %s172 = smul.addr %s171, 16
        %s173 = scalar_lea.vmem [#allocation2], %s172
        %p174 = pneg %p41
        %p175 = pneg %p38
        %p176 = pneg %p62
        %p177 = pneg %p59
        %p178 = pneg %p83
        %p179 = pneg %p80
        %p180 = pneg %p109
        %p181 = pneg %p106
        %s182 = sand.u32 %s96, 1
        %s183 = scalar_lea.sflag [#allocation4], %s182
        %s184 = sand.u32 %s96, 1
        %s185 = smul.addr %s184, 16
        %s186 = scalar_lea.vmem [#allocation5], %s185
        %v187 = vld [vmem:[%s164] sm:$0xff]
        %v188 = vld [vmem:[%s164 + $0x8] sm:$0xff]
        %v189 = vadd.f32 %v187, %v188
        %190 = vadd.xlane.f32.xlu0 %v189
        %v191 = vpop.xlane.xlu0 %190
        %v192 = vmul.f32 %v191, 0.00390625
        %v193 = vld [vmem:[%s1] sm:$0x3]
        %vm194 = vcmask 64512
        %v196 = vsel %vm194, %v193, 0
        %198 = vmatprep.subr.mxu0 0.0
        %199 = vmatpush1.msra.mxu0 0.0
        %200 = vmatprep.subr.mxu0 0.0
        %201 = vmatpush1.msra.mxu0 0.0
        %202 = vmatprep.subr.mxu0 0.0
        %203 = vmatpush1.msra.mxu0 0.0
        %204 = vmatprep.subr.mxu0 0.0
        %205 = vmatpush1.msra.mxu0 0.0
        %206 = vmatprep.subr.mxu0 0.0
        %207 = vmatpush1.msra.mxu0 0.0
        %208 = vmatprep.subr.mxu0 0.0
        %209 = vmatpush1.msra.mxu0 0.0
        %210 = vmatprep.subr.mxu0 0.0
        %211 = vmatpush1.msra.mxu0 0.0
        %212 = vmatprep.subr.mxu0 0.0
        %213 = vmatpush1.msra.mxu0 0.0
        %214 = vmatprep.subr.mxu0 0.0
        %215 = vmatpush1.msra.mxu0 0.0
        %216 = vmatprep.subr.mxu0 0.0
        %217 = vmatpush1.msra.mxu0 0.0
        %218 = vmatprep.subr.mxu0 0.0
        %219 = vmatpush1.msra.mxu0 0.0
        %220 = vmatprep.subr.mxu0 0.0
        %221 = vmatpush1.msra.mxu0 0.0
        %222 = vmatprep.subr.mxu0 0.0
        %223 = vmatpush1.msra.mxu0 0.0
        %224 = vmatprep.subr.mxu0 0.0
        %225 = vmatpush1.msra.mxu0 0.0
        %226 = vmatprep.subr.mxu0 0.0
        %227 = vmatpush1.msra.mxu0 0.0
        %228 = vmatprep.subr.mxu0 0.0
        %229 = vmatpush1.msra.mxu0 %v192
        %230 = vmatprep.subr.mxu0 0.0
        %231 = vmatpush2.msra.mxu0 0.0
        %232 = vmatprep.subr.mxu0 0.0
        %233 = vmatpush2.msra.mxu0 0.0
        %234 = vmatprep.subr.mxu0 0.0
        %235 = vmatpush2.msra.mxu0 0.0
        %236 = vmatprep.subr.mxu0 0.0
        %237 = vmatpush2.msra.mxu0 0.0
        %238 = vmatprep.subr.mxu0 0.0
        %239 = vmatpush2.msra.mxu0 0.0
        %240 = vmatprep.subr.mxu0 0.0
        %241 = vmatpush2.msra.mxu0 0.0
        %242 = vmatprep.subr.mxu0 0.0
        %243 = vmatpush2.msra.mxu0 0.0
        %244 = vmatprep.subr.mxu0 0.0
        %245 = vmatpush2.msra.mxu0 0.0
        %246 = vmatprep.subr.mxu0 0.0
        %247 = vmatpush2.msra.mxu0 0.0
        %248 = vmatprep.subr.mxu0 0.0
        %249 = vmatpush2.msra.mxu0 0.0
        %250 = vmatprep.subr.mxu0 0.0
        %251 = vmatpush2.msra.mxu0 0.0
        %252 = vmatprep.subr.mxu0 0.0
        %253 = vmatpush2.msra.mxu0 0.0
        %254 = vmatprep.subr.mxu0 0.0
        %255 = vmatpush2.msra.mxu0 0.0
        %256 = vmatprep.subr.mxu0 0.0
        %257 = vmatpush2.msra.mxu0 0.0
        %258 = vmatprep.subr.mxu0 0.0
        %259 = vmatpush2.msra.mxu0 0.0
        %260 = vmatprep.subr.mxu0 0.0
        %261 = vmatpush2.msra.mxu0 0.0
        %262 = vmatprep.mubr.f32.mxu0 0.0
        %263 = vmatmul.mubr.f32.gmra.mxu0 %v196
        %v264 = vpop.f32.mrf.mxu0
        %v265 = vadd.f32 0.0, %v264
        %v266 = vpop.f32.mrf.mxu0
        %267 = vdwg.mxu0
        %v268 = vmax.f32 %v265, 0.0
        %v269 = vld [vmem:[%s2] sm:$0xff]
        %vm270 = vcmask 15360
        %v272 = vsel %vm270, %v269, 0
        %vm274 = vcmask 1041408
        %v276 = vsel %vm274, %v268, 0
        %278 = vmatprep.subr.mxu0 0.0
        %279 = vmatpush1.msra.mxu0 0.0
        %280 = vmatprep.subr.mxu0 0.0
        %281 = vmatpush1.msra.mxu0 0.0
        %282 = vmatprep.subr.mxu0 0.0
        %283 = vmatpush1.msra.mxu0 0.0
        %284 = vmatprep.subr.mxu0 0.0
        %285 = vmatpush1.msra.mxu0 0.0
        %286 = vmatprep.subr.mxu0 0.0
        %287 = vmatpush1.msra.mxu0 0.0
        %288 = vmatprep.subr.mxu0 0.0
        %289 = vmatpush1.msra.mxu0 0.0
        %290 = vmatprep.subr.mxu0 0.0
        %291 = vmatpush1.msra.mxu0 0.0
        %292 = vmatprep.subr.mxu0 0.0
        %293 = vmatpush1.msra.mxu0 0.0
        %294 = vmatprep.subr.mxu0 0.0
        %295 = vmatpush1.msra.mxu0 0.0
        %296 = vmatprep.subr.mxu0 0.0
        %297 = vmatpush1.msra.mxu0 0.0
        %298 = vmatprep.subr.mxu0 0.0
        %299 = vmatpush1.msra.mxu0 0.0
        %300 = vmatprep.subr.mxu0 0.0
        %301 = vmatpush1.msra.mxu0 0.0
        %302 = vmatprep.subr.mxu0 0.0
        %303 = vmatpush1.msra.mxu0 0.0
        %304 = vmatprep.subr.mxu0 0.0
        %305 = vmatpush1.msra.mxu0 0.0
        %306 = vmatprep.subr.mxu0 0.0
        %307 = vmatpush1.msra.mxu0 0.0
        %308 = vmatprep.subr.mxu0 0.0
        %309 = vmatpush1.msra.mxu0 %v276
        %310 = vmatprep.subr.mxu0 0.0
        %311 = vmatpush2.msra.mxu0 0.0
        %312 = vmatprep.subr.mxu0 0.0
        %313 = vmatpush2.msra.mxu0 0.0
        %314 = vmatprep.subr.mxu0 0.0
        %315 = vmatpush2.msra.mxu0 0.0
        %316 = vmatprep.subr.mxu0 0.0
        %317 = vmatpush2.msra.mxu0 0.0
        %318 = vmatprep.subr.mxu0 0.0
        %319 = vmatpush2.msra.mxu0 0.0
        %320 = vmatprep.subr.mxu0 0.0
        %321 = vmatpush2.msra.mxu0 0.0
        %322 = vmatprep.subr.mxu0 0.0
        %323 = vmatpush2.msra.mxu0 0.0
        %324 = vmatprep.subr.mxu0 0.0
        %325 = vmatpush2.msra.mxu0 0.0
        %326 = vmatprep.subr.mxu0 0.0
        %327 = vmatpush2.msra.mxu0 0.0
        %328 = vmatprep.subr.mxu0 0.0
        %329 = vmatpush2.msra.mxu0 0.0
        %330 = vmatprep.subr.mxu0 0.0
        %331 = vmatpush2.msra.mxu0 0.0
        %332 = vmatprep.subr.mxu0 0.0
        %333 = vmatpush2.msra.mxu0 0.0
        %334 = vmatprep.subr.mxu0 0.0
        %335 = vmatpush2.msra.mxu0 0.0
        %336 = vmatprep.subr.mxu0 0.0
        %337 = vmatpush2.msra.mxu0 0.0
        %338 = vmatprep.subr.mxu0 0.0
        %339 = vmatpush2.msra.mxu0 0.0
        %340 = vmatprep.subr.mxu0 0.0
        %341 = vmatpush2.msra.mxu0 0.0
        %342 = vmatprep.mubr.f32.mxu0 0.0
        %343 = vmatmul.mubr.f32.gmra.mxu0 %v272
        %v344 = vpop.f32.mrf.mxu0
        %v345 = vadd.f32 0.0, %v344
        %v346 = vpop.f32.mrf.mxu0
        %347 = vdwg.mxu0
        %v348 = vxor.u32 %v345, 2147483648
        %v349 = vmul.f32 %v348, 1.442695
        %v350 = vpow.pop %v349
        %v351 = vadd.f32 %v350, 1.0
        %v352 = vrcp.pop %v351
        %v353 = vmul.f32 1.0, %v352
        %355 = vset.pattern.permute.xlu0 0
        %356 = vperm.xlu0 %355, %v353
        %v357 = vpop.permute.xlu0 %356
        %v359 = vmul.f32 %v187, %v357
        %v360 = vmul.f32 %v188, %v357
        %361 = vst [vmem:[%s186] sm:$0xff] %v359
        %362 = vst [vmem:[%s186 + $0x8] sm:$0xff] %v360
        %s363 = sand.u32 %s96, 1
        %s364 = scalar_lea.sflag [#allocation4], %s363
        %s365 = sand.u32 %s96, 1
        %s366 = smul.addr %s365, 16
        %s367 = scalar_lea.vmem [#allocation5], %s366
        // Predicated region
        $region37: #{tpu_custom_call.1} parent=31 // pred_check
          %p368 = pneg %p106
        $region38: #{tpu_custom_call.1} parent=31 // pred_check_branch
          %370 = sbr.rel (%p368) target = $region40
        $region39: #{tpu_custom_call.1} parent=31 // pred_region
          %s372 = ssub.s32 256, 256
          %373 = vsyncadd %s364, %s372
          %s374 = smul.addr %s20, 2
          %s375 = smul.addr %s374, 128
          %s376 = scalar_lea.hbm %s3, %s375
          %s378 = sshll.u32 %s367, 4
          %s379 = int_to_ptr.vmem [resolvable:$true] %s378
          %381 = dma.vmem_to_hbm [thread:$0]  %s379, 256, %s376, %s364
        $region40: #{tpu_custom_call.1} parent=31 // pred_fallthru
          _
      $region32: #{tpu_custom_call.1} parent=5 // pred_fallthru
        _
      %p382 = scmp.le.s32.totalorder 2, %s15
      // Predicated region
      $region41: #{tpu_custom_call.1} parent=5 // pred_check
        %p383 = pneg %p382
      $region42: #{tpu_custom_call.1} parent=5 // pred_check_branch
        %385 = sbr.rel (%p383) target = $region44
      $region43: #{tpu_custom_call.1} parent=5 // pred_region
        %s386 = ssub.s32 %s15, 2
        // Predicated region
        $region45: #{tpu_custom_call.1} parent=43 // pred_check
          %p387 = pneg %p112
        $region46: #{tpu_custom_call.1} parent=43 // pred_check_branch
          %389 = sbr.rel (%p387) target = $region48
        $region47: #{tpu_custom_call.1} parent=43 // pred_region
          %s390 = sand.u32 %s97, 1
          %s391 = scalar_lea.sflag [#allocation4], %s390
          %s392 = sand.u32 %s97, 1
          %s393 = smul.addr %s392, 16
          %s394 = scalar_lea.vmem [#allocation5], %s393
          %395 = dma.done %s391, 256
        $region48: #{tpu_custom_call.1} parent=43 // pred_fallthru
          _
      $region44: #{tpu_custom_call.1} parent=5 // pred_fallthru
        _
    $region6: #{tpu_custom_call.1} parent=1 // loop_footer
      %s19 = sadd.s32 1, %s15
    $region7: #{tpu_custom_call.1} parent=1 // loop_footer_branch
      %14 = sbr.rel target = $region3
    $region8: #{tpu_custom_call.1} parent=1 // loop_exit
      _
    %396 = vsyncpa [#allocation3], 1
    %s397 = scalar_lea.sflag [#allocation3], 1
    %398 = vsyncpa %s397, 1
    %399 = vsyncpa [#allocation4], 1
    %s400 = scalar_lea.sflag [#allocation4], 1
    %401 = vsyncpa %s400, 1

</llo_original>
